<compile_context>
chip_gen: v7x
topology: tpu7x:2x2x1
jax: 0.10.0
libtpu: 0.0.40
codegen_flags: <defaults>
</compile_context>

<pallas_src>
import jax
import jax.numpy as jnp
from jax import lax
from jax.experimental import pallas as pl
from jax.experimental.pallas import tpu as pltpu


NEG_SLOPE = 0.01  # nn.LeakyReLU default


def _leaky_relu(x):
    # Single VALU op (valid because 0 < NEG_SLOPE < 1).
    return jnp.maximum(x, NEG_SLOPE * x)


def encoder_kernel(obs_ref, ctx_ref,
                   w1o_ref, w1c_ref, b1_ref,
                   w2_ref, b2_ref,
                   w3_ref, b3_ref,
                   out_ref):
    # Layer 1: split first-layer matmul (replaces a wrapper-side concat).
    h = jnp.dot(obs_ref[...], w1o_ref[...], preferred_element_type=jnp.float32)
    h = h + jnp.dot(ctx_ref[...], w1c_ref[...], preferred_element_type=jnp.float32)
    h = _leaky_relu(h + b1_ref[...])

    # Layer 2: Linear + LeakyReLU.
    h = _leaky_relu(jnp.dot(h, w2_ref[...], preferred_element_type=jnp.float32)
                    + b2_ref[...])

    # Output layer: p = [mean | logvar]  (no activation).
    p = jnp.dot(h, w3_ref[...], preferred_element_type=jnp.float32) + b3_ref[...]

    # Single full-tile write: first half stays mean, second half becomes std.
    # The lane-iota select avoids intra-vreg slicing; the redundant exp/sqrt on
    # the mean lanes run on the EUP under existing slack (select discards any
    # inf they produce, so there is no NaN risk).
    latent_dim = out_ref.shape[-1] // 2
    lane = lax.broadcasted_iota(jnp.int32, p.shape, 1)
    std_all = jnp.sqrt(jnp.exp(p) + 1e-6)
    out_ref[...] = jnp.where(lane < latent_dim, p, std_all).astype(out_ref.dtype)


_TILE_B_MAX = 1024   # above this the f32 `h` intermediate alone fills the vreg file
_TILE_B_MIN = 128


def _choose_tile_b(batch):
    """Batch (sublane) tile. <=256: one block. Larger: biggest 8-aligned tile in
    [128, 1024] that still leaves >= ~4 grid steps (pipelining slack + both v7x
    TensorCores get work). VMEM is never the constraint for this kernel."""
    if batch <= 256:
        return batch
    tile = min(_TILE_B_MAX, max(_TILE_B_MIN, pl.cdiv(batch, 4)))
    return ((tile + 7) // 8) * 8          # keep the second-minor dim 8-aligned


def encoder_forward(obs, context, params):
    """Returns (mean, std) — loc/scale of the Normal produced by Encoder.forward."""
    (w1o, w1c, b1), (w2, b2), (w3, b3) = params

    batch = obs.shape[0]
    obs_dim = obs.shape[1]
    ctx_flat = context.reshape(batch, -1)            # context.flatten(1)
    ctx_dim = ctx_flat.shape[1]

    assert w1o.shape[0] == obs_dim and w1c.shape[0] == ctx_dim
    out_dim = w3.shape[1]
    assert out_dim % 2 == 0, "w3 output columns must be 2 * latent_dim"
    latent_dim = out_dim // 2
    h1 = w1o.shape[1]
    h2 = w2.shape[1]

    tile_b = _choose_tile_b(batch)
    grid = (pl.cdiv(batch, tile_b),)      # ragged last tile handled by Pallas

    batch_map = lambda i: (i, 0)          # tiles along batch
    rep_map = lambda i: (0, 0)            # weights/biases resident across the grid

    in_specs = [
        # For a v5e DMA-latency sweep, add pipeline_mode=pl.Buffered(3) to these two.
        pl.BlockSpec((tile_b, obs_dim), batch_map),
        pl.BlockSpec((tile_b, ctx_dim), batch_map),
        pl.BlockSpec((obs_dim, h1), rep_map),
        pl.BlockSpec((ctx_dim, h1), rep_map),
        pl.BlockSpec((1, h1), rep_map),
        pl.BlockSpec((h1, h2), rep_map),
        pl.BlockSpec((1, h2), rep_map),
        pl.BlockSpec((h2, out_dim), rep_map),
        pl.BlockSpec((1, out_dim), rep_map),
    ]
    out_spec = pl.BlockSpec((tile_b, out_dim), batch_map)

    out = pl.pallas_call(
        encoder_kernel,
        out_shape=jax.ShapeDtypeStruct((batch, out_dim), jnp.float32),
        grid=grid,
        in_specs=in_specs,
        out_specs=out_spec,
        compiler_params=pltpu.CompilerParams(
            # Batch axis is independent -> pipelined, and sharded across the two
            # TensorCores on v7x. (If a profile ever shows one TC idle, switch
            # this axis to pltpu.CORE_PARALLEL.)
            dimension_semantics=("parallel",),
            # Explicit bound only; actual footprint is < 1 MiB, so this never
            # constrains the tile choice on any generation.
            vmem_limit_bytes=32 * 1024 * 1024,
        ),
    )(obs, ctx_flat, w1o, w1c, b1, w2, b2, w3, b3)

    mean = out[:, :latent_dim]
    std = out[:, latent_dim:]
    return mean, std


def init_params(key, obs_dim, ctx_dim, hidden_dims, out_dim):
    """Deterministic init. Weights stored [in, out]; biases [1, out]. The first
    layer's weight is split row-wise into (w_obs, w_ctx) so the kernel never
    needs a concatenated input."""
    assert len(hidden_dims) == 2, "kernel implements the 3-linear-layer MLP"
    in_dim = obs_dim + ctx_dim
    dims = [in_dim] + list(hidden_dims) + [out_dim]
    layers = []
    for i in range(len(dims) - 1):
        key, kw, kb = jax.random.split(key, 3)
        bound = 1.0 / (dims[i] ** 0.5)
        w = jax.random.uniform(kw, (dims[i], dims[i + 1]), jnp.float32, -bound, bound)
        b = jax.random.uniform(kb, (1, dims[i + 1]), jnp.float32, -bound, bound)
        layers.append((w, b))
    (w1, b1), (w2, b2), (w3, b3) = layers
    return ((w1[:obs_dim], w1[obs_dim:], b1), (w2, b2), (w3, b3))


def _reference_forward(obs, context, params):
    """Pure-JAX reference mirroring the PyTorch module (for correctness check)."""
    (w1o, w1c, b1), (w2, b2), (w3, b3) = params
    x = jnp.concatenate([obs, context.reshape(obs.shape[0], -1)], axis=-1)
    w1 = jnp.concatenate([w1o, w1c], axis=0)
    hp = lax.Precision.HIGHEST
    h = _leaky_relu(jnp.dot(x, w1, precision=hp) + b1)
    h = _leaky_relu(jnp.dot(h, w2, precision=hp) + b2)
    p = jnp.dot(h, w3, precision=hp) + b3
    latent_dim = w3.shape[1] // 2
    mean, logvar = p[:, :latent_dim], p[:, latent_dim:]
    return mean, jnp.sqrt(jnp.exp(logvar) + 1e-6)


def _check(fwd, obs, context, params, latent_dim):
    mean, std = fwd(obs, context, params)
    jax.block_until_ready((mean, std))
    batch = obs.shape[0]
    assert mean.shape == (batch, latent_dim)
    assert std.shape == (batch, latent_dim)
    assert bool(jnp.all(std > 0.0))
    assert bool(jnp.all(jnp.isfinite(mean))) and bool(jnp.all(jnp.isfinite(std)))
    ref_mean, ref_std = _reference_forward(obs, context, params)
    assert bool(jnp.allclose(mean, ref_mean, rtol=1e-3, atol=1e-3))
    assert bool(jnp.allclose(std, ref_std, rtol=1e-3, atol=1e-3))


if __name__ == "__main__":
    # Small shapes consistent with the module's forward.
    obs_dim = 16
    context_dim = (2, 8)              # context_dim[0] * context_dim[1] = 16
    hidden_dims = [32, 32]
    latent_dim = 8
    params_per_latent = 2
    ctx_dim = context_dim[0] * context_dim[1]

    key = jax.random.PRNGKey(0)
    k_obs, k_ctx, k_par, k_obs2, k_ctx2 = jax.random.split(key, 5)

    params = init_params(k_par, obs_dim, ctx_dim, hidden_dims,
                         latent_dim * params_per_latent)

    fwd = jax.jit(encoder_forward)    # keep the mean/std slices fused with the call

    # Primary check: tiny batch (single-block path).
    batch = 2
    obs = jax.random.normal(k_obs, (batch, obs_dim), jnp.float32)
    context = jax.random.normal(k_ctx, (batch,) + context_dim, jnp.float32)
    _check(fwd, obs, context, params, latent_dim)

    # Secondary check: batch not divisible by 8 -> multi-step tiled grid with a
    # ragged final tile (the path the removed %8 fallback used to mishandle).
    big_batch = 1032                  # tile_b=264, grid=(4,)
    obs_b = jax.random.normal(k_obs2, (big_batch, obs_dim), jnp.float32)
    context_b = jax.random.normal(k_ctx2, (big_batch,) + context_dim, jnp.float32)
    _check(fwd, obs_b, context_b, params, latent_dim)

    # TODO(synk): torch.distributions.Normal object itself has no Pallas equivalent;
    # the kernel returns its (loc, scale) tensors.
    print("KERNEL_OK")
</pallas_src>

<mosaic_0001>
module attributes {stable_mosaic.version = 11 : i64} {
  func.func @encoder_kernel(%arg0: i32, %arg1: memref<2x16xf32, #tpu.memory_space<vmem>>, %arg2: memref<2x16xf32, #tpu.memory_space<vmem>>, %arg3: memref<16x32xf32, #tpu.memory_space<vmem>>, %arg4: memref<16x32xf32, #tpu.memory_space<vmem>>, %arg5: memref<1x32xf32, #tpu.memory_space<vmem>>, %arg6: memref<32x32xf32, #tpu.memory_space<vmem>>, %arg7: memref<1x32xf32, #tpu.memory_space<vmem>>, %arg8: memref<32x16xf32, #tpu.memory_space<vmem>>, %arg9: memref<1x16xf32, #tpu.memory_space<vmem>>, %arg10: memref<2x16xf32, #tpu.memory_space<vmem>>) attributes {dimension_semantics = [#tpu.dimension_semantics<parallel>], iteration_bounds = array<i64: 1>, scalar_prefetch = 0 : i64, scratch_operands = 0 : i64, tpu.core_type = #tpu.core_type<tc>, window_params = [{transform_indices = @transform_0, window_bounds = array<i64: 2, 16>}, {transform_indices = @transform_1, window_bounds = array<i64: 2, 16>}, {pipeline_mode = #tpu.pipeline_mode<synchronous>, transform_indices = @transform_2, window_bounds = array<i64: 16, 32>}, {pipeline_mode = #tpu.pipeline_mode<synchronous>, transform_indices = @transform_3, window_bounds = array<i64: 16, 32>}, {pipeline_mode = #tpu.pipeline_mode<synchronous>, transform_indices = @transform_4, window_bounds = array<i64: 1, 32>}, {pipeline_mode = #tpu.pipeline_mode<synchronous>, transform_indices = @transform_5, window_bounds = array<i64: 32, 32>}, {pipeline_mode = #tpu.pipeline_mode<synchronous>, transform_indices = @transform_6, window_bounds = array<i64: 1, 32>}, {pipeline_mode = #tpu.pipeline_mode<synchronous>, transform_indices = @transform_7, window_bounds = array<i64: 32, 16>}, {pipeline_mode = #tpu.pipeline_mode<synchronous>, transform_indices = @transform_8, window_bounds = array<i64: 1, 16>}, {transform_indices = @transform_9, window_bounds = array<i64: 2, 16>}]} {
    %c0 = arith.constant 0 : index
    %c0_0 = arith.constant 0 : index
    %0 = vector.load %arg1[%c0, %c0_0] : memref<2x16xf32, #tpu.memory_space<vmem>>, vector<2x16xf32>
    %c0_1 = arith.constant 0 : index
    %c0_2 = arith.constant 0 : index
    %1 = vector.load %arg3[%c0_1, %c0_2] : memref<16x32xf32, #tpu.memory_space<vmem>>, vector<16x32xf32>
    %cst = arith.constant dense<0.000000e+00> : vector<2x32xf32>
    %2 = tpu.matmul %0, %1, %cst {dimension_numbers = #tpu.dot_dimension_numbers<[1], [0], [0], [1], [0, 0, 1, 1], [], []>} : vector<2x16xf32>, vector<16x32xf32>, vector<2x32xf32> -> vector<2x32xf32>
    %c0_3 = arith.constant 0 : index
    %c0_4 = arith.constant 0 : index
    %3 = vector.load %arg2[%c0_3, %c0_4] : memref<2x16xf32, #tpu.memory_space<vmem>>, vector<2x16xf32>
    %c0_5 = arith.constant 0 : index
    %c0_6 = arith.constant 0 : index
    %4 = vector.load %arg4[%c0_5, %c0_6] : memref<16x32xf32, #tpu.memory_space<vmem>>, vector<16x32xf32>
    %cst_7 = arith.constant dense<0.000000e+00> : vector<2x32xf32>
    %5 = tpu.matmul %3, %4, %cst_7 {dimension_numbers = #tpu.dot_dimension_numbers<[1], [0], [0], [1], [0, 0, 1, 1], [], []>} : vector<2x16xf32>, vector<16x32xf32>, vector<2x32xf32> -> vector<2x32xf32>
    %6 = arith.addf %2, %5 : vector<2x32xf32>
    %c0_8 = arith.constant 0 : index
    %c0_9 = arith.constant 0 : index
    %7 = vector.load %arg5[%c0_8, %c0_9] : memref<1x32xf32, #tpu.memory_space<vmem>>, vector<1x32xf32>
    %8 = vector.broadcast %7 : vector<1x32xf32> to vector<2x32xf32>
    %9 = arith.addf %6, %8 : vector<2x32xf32>
    %cst_10 = arith.constant 0.00999999977 : f32
    %10 = vector.broadcast %cst_10 : f32 to vector<2x32xf32>
    %11 = arith.mulf %10, %9 : vector<2x32xf32>
    %12 = arith.maximumf %9, %11 : vector<2x32xf32>
    %c0_11 = arith.constant 0 : index
    %c0_12 = arith.constant 0 : index
    %13 = vector.load %arg6[%c0_11, %c0_12] : memref<32x32xf32, #tpu.memory_space<vmem>>, vector<32x32xf32>
    %cst_13 = arith.constant dense<0.000000e+00> : vector<2x32xf32>
    %14 = tpu.matmul %12, %13, %cst_13 {dimension_numbers = #tpu.dot_dimension_numbers<[1], [0], [0], [1], [0, 0, 1, 1], [], []>} : vector<2x32xf32>, vector<32x32xf32>, vector<2x32xf32> -> vector<2x32xf32>
    %c0_14 = arith.constant 0 : index
    %c0_15 = arith.constant 0 : index
    %15 = vector.load %arg7[%c0_14, %c0_15] : memref<1x32xf32, #tpu.memory_space<vmem>>, vector<1x32xf32>
    %16 = vector.broadcast %15 : vector<1x32xf32> to vector<2x32xf32>
    %17 = arith.addf %14, %16 : vector<2x32xf32>
    %cst_16 = arith.constant 0.00999999977 : f32
    %18 = vector.broadcast %cst_16 : f32 to vector<2x32xf32>
    %19 = arith.mulf %18, %17 : vector<2x32xf32>
    %20 = arith.maximumf %17, %19 : vector<2x32xf32>
    %c0_17 = arith.constant 0 : index
    %c0_18 = arith.constant 0 : index
    %21 = vector.load %arg8[%c0_17, %c0_18] : memref<32x16xf32, #tpu.memory_space<vmem>>, vector<32x16xf32>
    %cst_19 = arith.constant dense<0.000000e+00> : vector<2x16xf32>
    %22 = tpu.matmul %20, %21, %cst_19 {dimension_numbers = #tpu.dot_dimension_numbers<[1], [0], [0], [1], [0, 0, 1, 1], [], []>} : vector<2x32xf32>, vector<32x16xf32>, vector<2x16xf32> -> vector<2x16xf32>
    %c0_20 = arith.constant 0 : index
    %c0_21 = arith.constant 0 : index
    %23 = vector.load %arg9[%c0_20, %c0_21] : memref<1x16xf32, #tpu.memory_space<vmem>>, vector<1x16xf32>
    %24 = vector.broadcast %23 : vector<1x16xf32> to vector<2x16xf32>
    %25 = arith.addf %22, %24 : vector<2x16xf32>
    %26 = tpu.iota {dimensions = array<i32: 1>} : vector<2x16xi32>
    %27 = math.exp %25 : vector<2x16xf32>
    %cst_22 = arith.constant 9.99999997E-7 : f32
    %28 = vector.broadcast %cst_22 : f32 to vector<2x16xf32>
    %29 = arith.addf %27, %28 : vector<2x16xf32>
    %30 = math.sqrt %29 : vector<2x16xf32>
    %c8_i32 = arith.constant 8 : i32
    %31 = vector.broadcast %c8_i32 : i32 to vector<2x16xi32>
    %32 = arith.cmpi slt, %26, %31 : vector<2x16xi32>
    %33 = arith.select %32, %25, %30 : vector<2x16xi1>, vector<2x16xf32>
    %c0_23 = arith.constant 0 : index
    %c0_24 = arith.constant 0 : index
    %34 = vector.load %arg10[%c0_23, %c0_24] : memref<2x16xf32, #tpu.memory_space<vmem>>, vector<2x16xf32>
    tpu.vector_store %arg10[%c0_23, %c0_24], %33 {strides = array<i32>} : memref<2x16xf32, #tpu.memory_space<vmem>>, vector<2x16xf32>,
    return
  }
  func.func @transform_0(%arg0: i32) -> (i32, i32) {
    %c0_i32 = arith.constant 0 : i32
    %c0_i32_0 = arith.constant 0 : i32
    return %arg0, %c0_i32 : i32, i32
  }
  func.func @transform_1(%arg0: i32) -> (i32, i32) {
    %c0_i32 = arith.constant 0 : i32
    %c0_i32_0 = arith.constant 0 : i32
    return %arg0, %c0_i32 : i32, i32
  }
  func.func @transform_2(%arg0: i32) -> (i32, i32) {
    %c0_i32 = arith.constant 0 : i32
    %c0_i32_0 = arith.constant 0 : i32
    %c0_i32_1 = arith.constant 0 : i32
    return %c0_i32, %c0_i32_0 : i32, i32
  }
  func.func @transform_3(%arg0: i32) -> (i32, i32) {
    %c0_i32 = arith.constant 0 : i32
    %c0_i32_0 = arith.constant 0 : i32
    %c0_i32_1 = arith.constant 0 : i32
    return %c0_i32, %c0_i32_0 : i32, i32
  }
  func.func @transform_4(%arg0: i32) -> (i32, i32) {
    %c0_i32 = arith.constant 0 : i32
    %c0_i32_0 = arith.constant 0 : i32
    %c0_i32_1 = arith.constant 0 : i32
    return %c0_i32, %c0_i32_0 : i32, i32
  }
  func.func @transform_5(%arg0: i32) -> (i32, i32) {
    %c0_i32 = arith.constant 0 : i32
    %c0_i32_0 = arith.constant 0 : i32
    %c0_i32_1 = arith.constant 0 : i32
    return %c0_i32, %c0_i32_0 : i32, i32
  }
  func.func @transform_6(%arg0: i32) -> (i32, i32) {
    %c0_i32 = arith.constant 0 : i32
    %c0_i32_0 = arith.constant 0 : i32
    %c0_i32_1 = arith.constant 0 : i32
    return %c0_i32, %c0_i32_0 : i32, i32
  }
  func.func @transform_7(%arg0: i32) -> (i32, i32) {
    %c0_i32 = arith.constant 0 : i32
    %c0_i32_0 = arith.constant 0 : i32
    %c0_i32_1 = arith.constant 0 : i32
    return %c0_i32, %c0_i32_0 : i32, i32
  }
  func.func @transform_8(%arg0: i32) -> (i32, i32) {
    %c0_i32 = arith.constant 0 : i32
    %c0_i32_0 = arith.constant 0 : i32
    %c0_i32_1 = arith.constant 0 : i32
    return %c0_i32, %c0_i32_0 : i32, i32
  }
  func.func @transform_9(%arg0: i32) -> (i32, i32) {
    %c0_i32 = arith.constant 0 : i32
    %c0_i32_0 = arith.constant 0 : i32
    return %arg0, %c0_i32 : i32, i32
  }
}

</mosaic_0001>

<llo_original>
// kernel: encoder_forward.1
$region0: #{encoder_forward.1}
  #allocation0 [shape = 'u32[]', space=smem, size = 0x4, offset = 0x4, fixed_abs, tag = 'smem constant byte address 0x4 - core index']
  #allocation1 [shape = 'u32[144,128]{1,0:T(1,128)}', space=vmem, size = 0x12000, scoped, tag = 'internal scratch']
  %s0 = inlined_call_operand.hbm [shape: f32[2,16], index: 0, kind: input, shape index: {}]
  %s1 = inlined_call_operand.vmem [shape: f32[2,16], index: 1, kind: input, shape index: {}]
  %s2 = inlined_call_operand.vmem [shape: f32[16,32], index: 2, kind: input, shape index: {}]
  %s3 = inlined_call_operand.vmem [shape: f32[16,32], index: 3, kind: input, shape index: {}]
  %s4 = inlined_call_operand.hbm [shape: f32[1,32], index: 4, kind: input, shape index: {}]
  %s5 = inlined_call_operand.vmem [shape: f32[32,32], index: 5, kind: input, shape index: {}]
  %s6 = inlined_call_operand.hbm [shape: f32[1,32], index: 6, kind: input, shape index: {}]
  %s7 = inlined_call_operand.vmem [shape: f32[32,16], index: 7, kind: input, shape index: {}]
  %s8 = inlined_call_operand.vmem [shape: f32[1,16], index: 8, kind: input, shape index: {}]
  %s9 = inlined_call_operand.vmem [shape: f32[2,16], index: 9, kind: output, shape index: {}]
  %s10 = sld [smem:[#allocation0]]
  $region58: #{encoder_forward.1} parent=0
    _
  %s12 = ssub.s32 1, %s10
  %s13 = scalar_select 0, %s12, %s10
  $region1: #{encoder_forward.1} parent=0
    #allocation2 [shape = 'u8[1024]{0}', space=vmem, size = 0x400, scoped, tag = 'input window, operand 0, single buffered']
    #allocation3 [shape = 's32[1]{0}', space=sflag, size = 0x4, scoped, tag = 'scoped memory for encoder_forward.1']
    #allocation4 [shape = 'u8[512]{0}', space=vmem, size = 0x400, scoped, tag = 'input window, operand 4, single buffered']
    #allocation5 [shape = 's32[1]{0}', space=sflag, size = 0x4, scoped, tag = 'scoped memory for encoder_forward.1']
    #allocation6 [shape = 'u8[512]{0}', space=vmem, size = 0x400, scoped, tag = 'input window, operand 6, single buffered']
    %14 = vsyncpa [#allocation3], 0
    %15 = vsyncpa [#allocation5], 0
    // Predicated region
    $region2: #{encoder_forward.1} parent=1 // pred_check
      _
    $region3: #{encoder_forward.1} parent=1 // pred_check_branch
      %17 = sbr.rel (0) target = $region5
    $region4: #{encoder_forward.1} parent=1 // pred_region
      %s19 = ssub.s32 32, 32
      %20 = vsyncadd [#allocation3], %s19
      %s22 = sshll.u32 [#allocation2], 4
      %s23 = int_to_ptr.vmem [resolvable:$true] %s22
      %25 = dma.hbm_to_vmem [thread:$0]  %s0, 32, %s23, [#allocation3]
    $region5: #{encoder_forward.1} parent=1 // pred_fallthru
      _
    // Predicated region
    $region6: #{encoder_forward.1} parent=1 // pred_check
      _
    $region7: #{encoder_forward.1} parent=1 // pred_check_branch
      %27 = sbr.rel (0) target = $region9
    $region8: #{encoder_forward.1} parent=1 // pred_region
      _
    $region9: #{encoder_forward.1} parent=1 // pred_fallthru
      _
    // Predicated region
    $region10: #{encoder_forward.1} parent=1 // pred_check
      _
    $region11: #{encoder_forward.1} parent=1 // pred_check_branch
      %29 = sbr.rel (0) target = $region13
    $region12: #{encoder_forward.1} parent=1 // pred_region
      _
    $region13: #{encoder_forward.1} parent=1 // pred_fallthru
      _
    // Predicated region
    $region14: #{encoder_forward.1} parent=1 // pred_check
      _
    $region15: #{encoder_forward.1} parent=1 // pred_check_branch
      %31 = sbr.rel (0) target = $region17
    $region16: #{encoder_forward.1} parent=1 // pred_region
      _
    $region17: #{encoder_forward.1} parent=1 // pred_fallthru
      _
    // Predicated region
    $region18: #{encoder_forward.1} parent=1 // pred_check
      _
    $region19: #{encoder_forward.1} parent=1 // pred_check_branch
      %33 = sbr.rel (0) target = $region21
    $region20: #{encoder_forward.1} parent=1 // pred_region
      %s35 = ssub.s32 16, 16
      %36 = vsyncadd [#allocation5], %s35
      %s38 = sshll.u32 [#allocation4], 4
      %s39 = int_to_ptr.vmem [resolvable:$true] %s38
      %41 = dma.hbm_to_vmem [thread:$0]  %s4, 16, %s39, [#allocation5]
    $region21: #{encoder_forward.1} parent=1 // pred_fallthru
      _
    // Predicated region
    $region22: #{encoder_forward.1} parent=1 // pred_check
      _
    $region23: #{encoder_forward.1} parent=1 // pred_check_branch
      %43 = sbr.rel (0) target = $region25
    $region24: #{encoder_forward.1} parent=1 // pred_region
      _
    $region25: #{encoder_forward.1} parent=1 // pred_fallthru
      _
    // Predicated region
    $region26: #{encoder_forward.1} parent=1 // pred_check
      _
    $region27: #{encoder_forward.1} parent=1 // pred_check_branch
      %45 = sbr.rel (0) target = $region29
    $region28: #{encoder_forward.1} parent=1 // pred_region
      %s47 = ssub.s32 16, 16
      %48 = vsyncadd [#allocation5], %s47
      %s50 = sshll.u32 [#allocation6], 4
      %s51 = int_to_ptr.vmem [resolvable:$true] %s50
      %53 = dma.hbm_to_vmem [thread:$0]  %s6, 16, %s51, [#allocation5]
    $region29: #{encoder_forward.1} parent=1 // pred_fallthru
      _
    // Predicated region
    $region30: #{encoder_forward.1} parent=1 // pred_check
      _
    $region31: #{encoder_forward.1} parent=1 // pred_check_branch
      %55 = sbr.rel (0) target = $region33
    $region32: #{encoder_forward.1} parent=1 // pred_region
      _
    $region33: #{encoder_forward.1} parent=1 // pred_fallthru
      _
    // Predicated region
    $region34: #{encoder_forward.1} parent=1 // pred_check
      _
    $region35: #{encoder_forward.1} parent=1 // pred_check_branch
      %57 = sbr.rel (0) target = $region37
    $region36: #{encoder_forward.1} parent=1 // pred_region
      _
    $region37: #{encoder_forward.1} parent=1 // pred_fallthru
      _
    // Predicated region
    $region38: #{encoder_forward.1} parent=1 // pred_check
      _
    $region39: #{encoder_forward.1} parent=1 // pred_check_branch
      %59 = sbr.rel (0) target = $region41
    $region40: #{encoder_forward.1} parent=1 // pred_region
      %60 = dma.done [#allocation3], 32
    $region41: #{encoder_forward.1} parent=1 // pred_fallthru
      _
    // Predicated region
    $region42: #{encoder_forward.1} parent=1 // pred_check
      _
    $region43: #{encoder_forward.1} parent=1 // pred_check_branch
      %62 = sbr.rel (0) target = $region45
    $region44: #{encoder_forward.1} parent=1 // pred_region
      %63 = dma.done [#allocation5], 16
    $region45: #{encoder_forward.1} parent=1 // pred_fallthru
      _
    // Predicated region
    $region46: #{encoder_forward.1} parent=1 // pred_check
      _
    $region47: #{encoder_forward.1} parent=1 // pred_check_branch
      %65 = sbr.rel (0) target = $region49
    $region48: #{encoder_forward.1} parent=1 // pred_region
      %66 = dma.done [#allocation5], 16
    $region49: #{encoder_forward.1} parent=1 // pred_fallthru
      _
    %v67 = vld [vmem:[#allocation2] sm:$0x3]
    %v68 = vld [vmem:[%s2] sm:$0xff]
    %v69 = vld [vmem:[%s2 + $0x8] sm:$0xff]
    %v70 = vld [vmem:[%s1] sm:$0x3]
    %v71 = vld [vmem:[%s3] sm:$0xff]
    %v72 = vld [vmem:[%s3 + $0x8] sm:$0xff]
    %vm73 = vcmask 130048
    %v75 = vsel %vm73, %v70, 0
    %77 = vmatprep.subr.mxu0 0.0
    %78 = vmatpush1.msra.mxu0 %v71
    %79 = vmatprep.subr.mxu0 0.0
    %80 = vmatpush1.msra.mxu0 %v72
    %81 = vmatprep.subr.mxu0 0.0
    %82 = vmatpush1.msra.mxu0 0.0
    %83 = vmatprep.subr.mxu0 0.0
    %84 = vmatpush1.msra.mxu0 0.0
    %85 = vmatprep.subr.mxu0 0.0
    %86 = vmatpush1.msra.mxu0 0.0
    %87 = vmatprep.subr.mxu0 0.0
    %88 = vmatpush1.msra.mxu0 0.0
    %89 = vmatprep.subr.mxu0 0.0
    %90 = vmatpush1.msra.mxu0 0.0
    %91 = vmatprep.subr.mxu0 0.0
    %92 = vmatpush1.msra.mxu0 0.0
    %93 = vmatprep.subr.mxu0 0.0
    %94 = vmatpush1.msra.mxu0 0.0
    %95 = vmatprep.subr.mxu0 0.0
    %96 = vmatpush1.msra.mxu0 0.0
    %97 = vmatprep.subr.mxu0 0.0
    %98 = vmatpush1.msra.mxu0 0.0
    %99 = vmatprep.subr.mxu0 0.0
    %100 = vmatpush1.msra.mxu0 0.0
    %101 = vmatprep.subr.mxu0 0.0
    %102 = vmatpush1.msra.mxu0 0.0
    %103 = vmatprep.subr.mxu0 0.0
    %104 = vmatpush1.msra.mxu0 0.0
    %105 = vmatprep.subr.mxu0 0.0
    %106 = vmatpush1.msra.mxu0 0.0
    %107 = vmatprep.subr.mxu0 0.0
    %108 = vmatpush1.msra.mxu0 0.0
    %109 = vmatprep.subr.mxu0 0.0
    %110 = vmatpush1.msra.mxu0 0.0
    %111 = vmatprep.subr.mxu0 0.0
    %112 = vmatpush1.msra.mxu0 0.0
    %113 = vmatprep.subr.mxu0 0.0
    %114 = vmatpush1.msra.mxu0 0.0
    %115 = vmatprep.subr.mxu0 0.0
    %116 = vmatpush1.msra.mxu0 0.0
    %117 = vmatprep.subr.mxu0 0.0
    %118 = vmatpush1.msra.mxu0 0.0
    %119 = vmatprep.subr.mxu0 0.0
    %120 = vmatpush1.msra.mxu0 0.0
    %121 = vmatprep.subr.mxu0 0.0
    %122 = vmatpush1.msra.mxu0 0.0
    %123 = vmatprep.subr.mxu0 0.0
    %124 = vmatpush1.msra.mxu0 0.0
    %125 = vmatprep.subr.mxu0 0.0
    %126 = vmatpush1.msra.mxu0 0.0
    %127 = vmatprep.subr.mxu0 0.0
    %128 = vmatpush1.msra.mxu0 0.0
    %129 = vmatprep.subr.mxu0 0.0
    %130 = vmatpush1.msra.mxu0 0.0
    %131 = vmatprep.subr.mxu0 0.0
    %132 = vmatpush1.msra.mxu0 0.0
    %133 = vmatprep.subr.mxu0 0.0
    %134 = vmatpush1.msra.mxu0 0.0
    %135 = vmatprep.subr.mxu0 0.0
    %136 = vmatpush1.msra.mxu0 0.0
    %137 = vmatprep.subr.mxu0 0.0
    %138 = vmatpush1.msra.mxu0 0.0
    %139 = vmatprep.subr.mxu0 0.0
    %140 = vmatpush1.msra.mxu0 0.0
    %141 = vmatprep.mubr.f32.mxu0 0.0
    %142 = vmatmul.mubr.f32.gmra.mrb[0].mxu0 %v75
    %v143 = vpop.f32.mrb[0].mxu0
    %v144 = vadd.f32 0.0, %v143
    %v145 = vpop.f32.mrb[0].mxu0
    %146 = vdwg.mxu0
    %v148 = vsel %vm73, %v67, 0
    %150 = vmatprep.subr.mxu0 0.0
    %151 = vmatpush1.msra.mxu0 %v68
    %152 = vmatprep.subr.mxu0 0.0
    %153 = vmatpush1.msra.mxu0 %v69
    %154 = vmatprep.subr.mxu0 0.0
    %155 = vmatpush1.msra.mxu0 0.0
    %156 = vmatprep.subr.mxu0 0.0
    %157 = vmatpush1.msra.mxu0 0.0
    %158 = vmatprep.subr.mxu0 0.0
    %159 = vmatpush1.msra.mxu0 0.0
    %160 = vmatprep.subr.mxu0 0.0
    %161 = vmatpush1.msra.mxu0 0.0
    %162 = vmatprep.subr.mxu0 0.0
    %163 = vmatpush1.msra.mxu0 0.0
    %164 = vmatprep.subr.mxu0 0.0
    %165 = vmatpush1.msra.mxu0 0.0
    %166 = vmatprep.subr.mxu0 0.0
    %167 = vmatpush1.msra.mxu0 0.0
    %168 = vmatprep.subr.mxu0 0.0
    %169 = vmatpush1.msra.mxu0 0.0
    %170 = vmatprep.subr.mxu0 0.0
    %171 = vmatpush1.msra.mxu0 0.0
    %172 = vmatprep.subr.mxu0 0.0
    %173 = vmatpush1.msra.mxu0 0.0
    %174 = vmatprep.subr.mxu0 0.0
    %175 = vmatpush1.msra.mxu0 0.0
    %176 = vmatprep.subr.mxu0 0.0
    %177 = vmatpush1.msra.mxu0 0.0
    %178 = vmatprep.subr.mxu0 0.0
    %179 = vmatpush1.msra.mxu0 0.0
    %180 = vmatprep.subr.mxu0 0.0
    %181 = vmatpush1.msra.mxu0 0.0
    %182 = vmatprep.subr.mxu0 0.0
    %183 = vmatpush1.msra.mxu0 0.0
    %184 = vmatprep.subr.mxu0 0.0
    %185 = vmatpush1.msra.mxu0 0.0
    %186 = vmatprep.subr.mxu0 0.0
    %187 = vmatpush1.msra.mxu0 0.0
    %188 = vmatprep.subr.mxu0 0.0
    %189 = vmatpush1.msra.mxu0 0.0
    %190 = vmatprep.subr.mxu0 0.0
    %191 = vmatpush1.msra.mxu0 0.0
    %192 = vmatprep.subr.mxu0 0.0
    %193 = vmatpush1.msra.mxu0 0.0
    %194 = vmatprep.subr.mxu0 0.0
    %195 = vmatpush1.msra.mxu0 0.0
    %196 = vmatprep.subr.mxu0 0.0
    %197 = vmatpush1.msra.mxu0 0.0
    %198 = vmatprep.subr.mxu0 0.0
    %199 = vmatpush1.msra.mxu0 0.0
    %200 = vmatprep.subr.mxu0 0.0
    %201 = vmatpush1.msra.mxu0 0.0
    %202 = vmatprep.subr.mxu0 0.0
    %203 = vmatpush1.msra.mxu0 0.0
    %204 = vmatprep.subr.mxu0 0.0
    %205 = vmatpush1.msra.mxu0 0.0
    %206 = vmatprep.subr.mxu0 0.0
    %207 = vmatpush1.msra.mxu0 0.0
    %208 = vmatprep.subr.mxu0 0.0
    %209 = vmatpush1.msra.mxu0 0.0
    %210 = vmatprep.subr.mxu0 0.0
    %211 = vmatpush1.msra.mxu0 0.0
    %212 = vmatprep.subr.mxu0 0.0
    %213 = vmatpush1.msra.mxu0 0.0
    %214 = vmatprep.mubr.f32.mxu0 0.0
    %215 = vmatmul.mubr.f32.gmra.mrb[0].mxu0 %v148
    %v216 = vpop.f32.mrb[0].mxu0
    %v217 = vadd.f32 %v144, %v216
    %v218 = vpop.f32.mrb[0].mxu0
    %219 = vdwg.mxu0
    %v220 = vld [vmem:[#allocation4] sm:$0x1]
    %v222 = vlaneseq
    %v223 = vshrl.u32 %v222, 7
    %v224 = vsub.s32 0, %v223
    %v225 = vrot.slane %v220, %v224
    %v227 = vadd.f32 %v217, %v225
    %v228 = vmul.f32 %v227, 0.01
    %v229 = vmax.f32 %v227, %v228
    %v230 = vld [vmem:[%s5] sm:$0xff]
    %v231 = vld [vmem:[%s5 + $0x8] sm:$0xff]
    %v232 = vld [vmem:[%s5 + $0x10] sm:$0xff]
    %v233 = vld [vmem:[%s5 + $0x18] sm:$0xff]
    %v234 = vld [vmem:[#allocation6] sm:$0x1]
    %v236 = vlaneseq
    %v237 = vshrl.u32 %v236, 7
    %v238 = vsub.s32 0, %v237
    %v239 = vrot.slane %v234, %v238
    %vm241 = vcmask 261120
    %v243 = vsel %vm241, %v229, 0
    %245 = vmatprep.subr.mxu0 0.0
    %246 = vmatpush1.msra.mxu0 %v230
    %247 = vmatprep.subr.mxu0 0.0
    %248 = vmatpush1.msra.mxu0 %v231
    %249 = vmatprep.subr.mxu0 0.0
    %250 = vmatpush1.msra.mxu0 %v232
    %251 = vmatprep.subr.mxu0 0.0
    %252 = vmatpush1.msra.mxu0 %v233
    %253 = vmatprep.subr.mxu0 0.0
    %254 = vmatpush1.msra.mxu0 0.0
    %255 = vmatprep.subr.mxu0 0.0
    %256 = vmatpush1.msra.mxu0 0.0
    %257 = vmatprep.subr.mxu0 0.0
    %258 = vmatpush1.msra.mxu0 0.0
    %259 = vmatprep.subr.mxu0 0.0
    %260 = vmatpush1.msra.mxu0 0.0
    %261 = vmatprep.subr.mxu0 0.0
    %262 = vmatpush1.msra.mxu0 0.0
    %263 = vmatprep.subr.mxu0 0.0
    %264 = vmatpush1.msra.mxu0 0.0
    %265 = vmatprep.subr.mxu0 0.0
    %266 = vmatpush1.msra.mxu0 0.0
    %267 = vmatprep.subr.mxu0 0.0
    %268 = vmatpush1.msra.mxu0 0.0
    %269 = vmatprep.subr.mxu0 0.0
    %270 = vmatpush1.msra.mxu0 0.0
    %271 = vmatprep.subr.mxu0 0.0
    %272 = vmatpush1.msra.mxu0 0.0
    %273 = vmatprep.subr.mxu0 0.0
    %274 = vmatpush1.msra.mxu0 0.0
    %275 = vmatprep.subr.mxu0 0.0
    %276 = vmatpush1.msra.mxu0 0.0
    %277 = vmatprep.subr.mxu0 0.0
    %278 = vmatpush1.msra.mxu0 0.0
    %279 = vmatprep.subr.mxu0 0.0
    %280 = vmatpush1.msra.mxu0 0.0
    %281 = vmatprep.subr.mxu0 0.0
    %282 = vmatpush1.msra.mxu0 0.0
    %283 = vmatprep.subr.mxu0 0.0
    %284 = vmatpush1.msra.mxu0 0.0
    %285 = vmatprep.subr.mxu0 0.0
    %286 = vmatpush1.msra.mxu0 0.0
    %287 = vmatprep.subr.mxu0 0.0
    %288 = vmatpush1.msra.mxu0 0.0
    %289 = vmatprep.subr.mxu0 0.0
    %290 = vmatpush1.msra.mxu0 0.0
    %291 = vmatprep.subr.mxu0 0.0
    %292 = vmatpush1.msra.mxu0 0.0
    %293 = vmatprep.subr.mxu0 0.0
    %294 = vmatpush1.msra.mxu0 0.0
    %295 = vmatprep.subr.mxu0 0.0
    %296 = vmatpush1.msra.mxu0 0.0
    %297 = vmatprep.subr.mxu0 0.0
    %298 = vmatpush1.msra.mxu0 0.0
    %299 = vmatprep.subr.mxu0 0.0
    %300 = vmatpush1.msra.mxu0 0.0
    %301 = vmatprep.subr.mxu0 0.0
    %302 = vmatpush1.msra.mxu0 0.0
    %303 = vmatprep.subr.mxu0 0.0
    %304 = vmatpush1.msra.mxu0 0.0
    %305 = vmatprep.subr.mxu0 0.0
    %306 = vmatpush1.msra.mxu0 0.0
    %307 = vmatprep.subr.mxu0 0.0
    %308 = vmatpush1.msra.mxu0 0.0
    %309 = vmatprep.mubr.f32.mxu0 0.0
    %310 = vmatmul.mubr.f32.gmra.mrb[0].mxu0 %v243
    %v311 = vpop.f32.mrb[0].mxu0
    %v312 = vadd.f32 %v239, %v311
    %v313 = vpop.f32.mrb[0].mxu0
    %314 = vdwg.mxu0
    %v315 = vmul.f32 %v312, 0.01
    %v316 = vmax.f32 %v312, %v315
    %v317 = vld [vmem:[%s7] sm:$0xff]
    %v318 = vld [vmem:[%s7 + $0x8] sm:$0xff]
    %v319 = vld [vmem:[%s7 + $0x10] sm:$0xff]
    %v320 = vld [vmem:[%s7 + $0x18] sm:$0xff]
    %v321 = vld [vmem:[%s8] sm:$0x1]
    %v323 = vlaneseq
    %v324 = vshrl.u32 %v323, 7
    %v325 = vsub.s32 0, %v324
    %v326 = vrot.slane %v321, %v325
    %v329 = vsel %vm241, %v316, 0
    %331 = vmatprep.subr.mxu0 0.0
    %332 = vmatpush1.msra.mxu0 %v317
    %333 = vmatprep.subr.mxu0 0.0
    %334 = vmatpush1.msra.mxu0 %v318
    %335 = vmatprep.subr.mxu0 0.0
    %336 = vmatpush1.msra.mxu0 %v319
    %337 = vmatprep.subr.mxu0 0.0
    %338 = vmatpush1.msra.mxu0 %v320
    %339 = vmatprep.subr.mxu0 0.0
    %340 = vmatpush1.msra.mxu0 0.0
    %341 = vmatprep.subr.mxu0 0.0
    %342 = vmatpush1.msra.mxu0 0.0
    %343 = vmatprep.subr.mxu0 0.0
    %344 = vmatpush1.msra.mxu0 0.0
    %345 = vmatprep.subr.mxu0 0.0
    %346 = vmatpush1.msra.mxu0 0.0
    %347 = vmatprep.subr.mxu0 0.0
    %348 = vmatpush1.msra.mxu0 0.0
    %349 = vmatprep.subr.mxu0 0.0
    %350 = vmatpush1.msra.mxu0 0.0
    %351 = vmatprep.subr.mxu0 0.0
    %352 = vmatpush1.msra.mxu0 0.0
    %353 = vmatprep.subr.mxu0 0.0
    %354 = vmatpush1.msra.mxu0 0.0
    %355 = vmatprep.subr.mxu0 0.0
    %356 = vmatpush1.msra.mxu0 0.0
    %357 = vmatprep.subr.mxu0 0.0
    %358 = vmatpush1.msra.mxu0 0.0
    %359 = vmatprep.subr.mxu0 0.0
    %360 = vmatpush1.msra.mxu0 0.0
    %361 = vmatprep.subr.mxu0 0.0
    %362 = vmatpush1.msra.mxu0 0.0
    %363 = vmatprep.subr.mxu0 0.0
    %364 = vmatpush1.msra.mxu0 0.0
    %365 = vmatprep.subr.mxu0 0.0
    %366 = vmatpush1.msra.mxu0 0.0
    %367 = vmatprep.subr.mxu0 0.0
    %368 = vmatpush1.msra.mxu0 0.0
    %369 = vmatprep.subr.mxu0 0.0
    %370 = vmatpush1.msra.mxu0 0.0
    %371 = vmatprep.subr.mxu0 0.0
    %372 = vmatpush1.msra.mxu0 0.0
    %373 = vmatprep.subr.mxu0 0.0
    %374 = vmatpush1.msra.mxu0 0.0
    %375 = vmatprep.subr.mxu0 0.0
    %376 = vmatpush1.msra.mxu0 0.0
    %377 = vmatprep.subr.mxu0 0.0
    %378 = vmatpush1.msra.mxu0 0.0
    %379 = vmatprep.subr.mxu0 0.0
    %380 = vmatpush1.msra.mxu0 0.0
    %381 = vmatprep.subr.mxu0 0.0
    %382 = vmatpush1.msra.mxu0 0.0
    %383 = vmatprep.subr.mxu0 0.0
    %384 = vmatpush1.msra.mxu0 0.0
    %385 = vmatprep.subr.mxu0 0.0
    %386 = vmatpush1.msra.mxu0 0.0
    %387 = vmatprep.subr.mxu0 0.0
    %388 = vmatpush1.msra.mxu0 0.0
    %389 = vmatprep.subr.mxu0 0.0
    %390 = vmatpush1.msra.mxu0 0.0
    %391 = vmatprep.subr.mxu0 0.0
    %392 = vmatpush1.msra.mxu0 0.0
    %393 = vmatprep.subr.mxu0 0.0
    %394 = vmatpush1.msra.mxu0 0.0
    %395 = vmatprep.mubr.f32.mxu0 0.0
    %396 = vmatmul.mubr.f32.gmra.mrb[0].mxu0 %v329
    %v397 = vpop.f32.mrb[0].mxu0
    %v398 = vadd.f32 %v326, %v397
    %v399 = vpop.f32.mrb[0].mxu0
    %400 = vdwg.mxu0
    %v401 = vlaneseq
    %v402 = vand.u32 %v401, 127
    %v403 = vmul.f32 %v398, 1.442695
    %v404 = vpow.pop %v403
    %v405 = vadd.f32 %v404, 1e-06
    %v406 = vrsqrt.pop %v405
    %v407 = vmul.f32 %v405, %v406
    %vm408 = vcmp.eq.f32.partialorder %v405, inf
    %v409 = vsel %vm408, %v405, %v407
    %vm410 = vcmp.eq.f32.partialorder %v405, 0.0
    %v411 = vand.u32 %v405, 2147483648
    %v412 = vsel %vm410, %v411, %v409
    %vm413 = vcmp.lt.s32.totalorder %v402, 8
    %v414 = vsel %vm413, %v398, %v412
    %vm415 = vcmask 123904
    %416 = vst.msk [vmem:[%s9] sm:$0x3] %vm415, %v414
    // Predicated region
    $region50: #{encoder_forward.1} parent=1 // pred_check
      _
    $region51: #{encoder_forward.1} parent=1 // pred_check_branch
      %418 = sbr.rel (0) target = $region53
    $region52: #{encoder_forward.1} parent=1 // pred_region
      _
    $region53: #{encoder_forward.1} parent=1 // pred_fallthru
      _
    // Predicated region
    $region54: #{encoder_forward.1} parent=1 // pred_check
      _
    $region55: #{encoder_forward.1} parent=1 // pred_check_branch
      %420 = sbr.rel (0) target = $region57
    $region56: #{encoder_forward.1} parent=1 // pred_region
      _
    $region57: #{encoder_forward.1} parent=1 // pred_fallthru
      _
    %421 = vsyncpa [#allocation3], 1
    %422 = vsyncpa [#allocation5], 1

</llo_original>
